<compile_context>
chip_gen: v5e
topology: v5e:2x2
jax: 0.10.0
libtpu: 0.0.40
codegen_flags: <defaults>
</compile_context>

<pallas_src>
import jax
import jax.numpy as jnp
from jax.experimental import pallas as pl
from jax.experimental.pallas import tpu as pltpu

# ---- small, lane-aligned, module-consistent sizes ----------------------------
BS = 2            # batch
T = 5             # target_len (teacher-forced decode length)
N_CLASS = 128
EMB_DIM = 128
ENC_DIM = 128
DEC_DIM = 128
ATTN_DIM = 128
W_SP, H_SP = 4, 4
L = W_SP * H_SP

# ---- column layout of the packed slabs (all offsets/widths 128-aligned) -------
A_EMB = 0                                   # embedding table        (N_CLASS, EMB)
A_AE = A_EMB + EMB_DIM                      # ae_w.T                 (ENC, ATTN)
A_H = A_AE + ATTN_DIM                       # [ad_w.T | w_hh.T]      (DEC, ATTN+4*DEC)
A_WIH = A_H + ATTN_DIM + 4 * DEC_DIM        # w_ih.T                 (DEC, 4*DEC)
A_OUT = A_WIH + 4 * DEC_DIM                 # out_w.T                (DEC, N_CLASS)
WA_COLS = A_OUT + N_CLASS                   # 1536

B_ATTN = 0                                  # ae_b + ad_b (folded)
B_AF = B_ATTN + ATTN_DIM                    # af_w (af_b dropped: softmax-invariant)
B_CAT = B_AF + ATTN_DIM                     # cat_b
B_G = B_CAT + DEC_DIM                       # b_ih + b_hh
B_OUT = B_G + 4 * DEC_DIM                   # out_b
B_COLS = B_OUT + N_CLASS                    # 1024


# ---- fused multi-step decoder kernel ------------------------------------------
def decoder_steps_kernel(
    tok_ref,     # SMEM (num_steps*BS,) int32 : teacher-forced token ids
    v_ref,       # (BS, L, ENC)     encoder map, resident
    hc_ref,      # (BS, 2*DEC)      initial [h | c], resident
    wa_ref,      # (128, WA_COLS)   packed 128-row weight slab, resident
    catw_ref,    # (EMB+ENC, DEC)   concat-Linear weight (pre-T), resident
    b_ref,       # (1, B_COLS)      packed bias row, resident
    logp_ref,    # (1, BS, N_CLASS) per-step log-probs (block t)
    state_ref,   # (BS, 2*DEC)      resident carried [h | c] (also final output)
    ep_s,        # VMEM scratch (BS, L, ATTN): step-invariant encoder projection
):
    f32 = jnp.float32
    t = pl.program_id(0)

    @pl.when(t == 0)
    def _init():
        # carried state lives in the resident output block
        state_ref[...] = hc_ref[...]
        # step-invariant encoder projection (+ folded ae_b+ad_b), computed once
        v2 = v_ref[...].reshape(BS * L, ENC_DIM)
        ep = (jnp.dot(v2, wa_ref[:, A_AE:A_AE + ATTN_DIM],
                      preferred_element_type=f32)
              + b_ref[:, B_ATTN:B_ATTN + ATTN_DIM])
        ep_s[...] = ep.reshape(BS, L, ATTN_DIM)

    h = state_ref[:, :DEC_DIM]
    c = state_ref[:, DEC_DIM:]

    # ---- embedding of token t: one 2-D one-hot compare + MXU matmul ----
    # (out-of-range ids give a zero embedding; PyTorch Embedding would error)
    lane = jax.lax.broadcasted_iota(jnp.int32, (BS, N_CLASS), 1)
    row = jax.lax.broadcasted_iota(jnp.int32, (BS, N_CLASS), 0)
    ids = jnp.zeros((BS, N_CLASS), jnp.int32)
    for b in range(BS):                       # BS scalar selects, no sublane concat
        ids = jnp.where(row == b, tok_ref[t * BS + b], ids)
    onehot = (lane == ids).astype(f32)
    embed = jnp.dot(onehot, wa_ref[:, A_EMB:A_EMB + EMB_DIM],
                    preferred_element_type=f32)                    # (BS, EMB)

    # ---- everything consuming the old h in ONE (BS,128)x(128,640) matmul ----
    hp = jnp.dot(h, wa_ref[:, A_H:A_H + ATTN_DIM + 4 * DEC_DIM],
                 preferred_element_type=f32)                       # (BS, 640)
    dec_p = hp[:, :ATTN_DIM]                                       # attention dec proj
    h_gates = hp[:, ATTN_DIM:]                                     # h_{t-1} @ w_hh.T

    # ---- additive attention over L spatial positions ----
    e = jnp.tanh(ep_s[...] + dec_p[:, None, :])                    # (BS, L, ATTN)
    af = b_ref[:, B_AF:B_AF + ATTN_DIM]                            # (1, ATTN)
    scores = jnp.sum(e * af[None, :, :], axis=-1, keepdims=True)   # (BS, L, 1)
    m = jnp.max(scores, axis=1, keepdims=True)
    p = jnp.exp(scores - m)
    alpha = p / jnp.sum(p, axis=1, keepdims=True)                  # exact softmax
    context = jnp.sum(alpha * v_ref[...], axis=1)                  # (BS, ENC)

    # ---- concat Linear as one (BS,256)x(256,128) matmul ----
    xcat = jnp.concatenate([embed, context], axis=1)               # lane-aligned
    rnn_in = (jnp.dot(xcat, catw_ref[...], preferred_element_type=f32)
              + b_ref[:, B_CAT:B_CAT + DEC_DIM])                   # (BS, DEC)

    # ---- LSTM cell (PyTorch gate order i, f, g, o) ----
    gates = (jnp.dot(rnn_in, wa_ref[:, A_WIH:A_WIH + 4 * DEC_DIM],
                     preferred_element_type=f32)
             + h_gates + b_ref[:, B_G:B_G + 4 * DEC_DIM])          # (BS, 4*DEC)
    i_g = jax.nn.sigmoid(gates[:, 0 * DEC_DIM:1 * DEC_DIM])
    f_g = jax.nn.sigmoid(gates[:, 1 * DEC_DIM:2 * DEC_DIM])
    g_g = jnp.tanh(gates[:, 2 * DEC_DIM:3 * DEC_DIM])
    o_g = jax.nn.sigmoid(gates[:, 3 * DEC_DIM:4 * DEC_DIM])
    c_new = f_g * c + i_g * g_g
    h_new = o_g * jnp.tanh(c_new)

    # ---- output projection + log-softmax (lane-dense) ----
    logits = (jnp.dot(h_new, wa_ref[:, A_OUT:A_OUT + N_CLASS],
                      preferred_element_type=f32)
              + b_ref[:, B_OUT:B_OUT + N_CLASS])
    z = logits - jnp.max(logits, axis=-1, keepdims=True)
    logp = z - jnp.log(jnp.sum(jnp.exp(z), axis=-1, keepdims=True))

    logp_ref[...] = logp[None]
    state_ref[:, :DEC_DIM] = h_new
    state_ref[:, DEC_DIM:] = c_new


# ---- one-time weight repacking into 3 DMA slabs --------------------------------
def pack_params(p):
    wa = jnp.concatenate([
        p["emb_w"],           # (N_CLASS, EMB)
        p["ae_w"].T,          # (ENC, ATTN)
        p["ad_w"].T,          # (DEC, ATTN)   \ fused old-h operand
        p["w_hh"].T,          # (DEC, 4*DEC)  /
        p["w_ih"].T,          # (DEC, 4*DEC)
        p["out_w"].T,         # (DEC, N_CLASS)
    ], axis=1)                # (128, 1536)
    brow = jnp.concatenate([
        p["ae_b"] + p["ad_b"],    # attention biases folded
        p["af_w"],                # score vector (af_b dropped: softmax-invariant)
        p["cat_b"],
        p["b_ih"] + p["b_hh"],
        p["out_b"],
    ], axis=1)                # (1, 1024)
    return {"wa": wa, "catw": p["cat_w"].T, "brow": brow}


# ---- fused-loop driver ----------------------------------------------------------
def _decode_steps(packed, tokens, encoder_out, hc):
    """Run num_steps teacher-forced decoder steps in ONE pallas_call.
    tokens: (num_steps, BS) int32; hc: (BS, 2*DEC) packed [h | c]."""
    num_steps = tokens.shape[0]
    bs, enc_dim, w, hh = encoder_out.shape
    # (bs, enc, w, h) -> (bs, L, enc). One tiny (16 KiB) transpose per whole
    # fused decode (not per step), so its launch cost is fully amortized.
    v_t = jnp.transpose(encoder_out.reshape(bs, enc_dim, w * hh), (0, 2, 1))
    tok_flat = tokens.reshape(num_steps * BS).astype(jnp.int32)

    cmap = lambda t, tok: (0, 0)          # resident block: DMA'd HBM->VMEM once
    grid_spec = pltpu.PrefetchScalarGridSpec(
        num_scalar_prefetch=1,            # token ids -> SMEM
        grid=(num_steps,),
        in_specs=[
            pl.BlockSpec((BS, L, ENC_DIM), lambda t, tok: (0, 0, 0)),
            pl.BlockSpec((BS, 2 * DEC_DIM), cmap),
            pl.BlockSpec((EMB_DIM, WA_COLS), cmap),
            pl.BlockSpec((EMB_DIM + ENC_DIM, DEC_DIM), cmap),
            pl.BlockSpec((1, B_COLS), cmap),
        ],
        out_specs=(
            pl.BlockSpec((1, BS, N_CLASS), lambda t, tok: (t, 0, 0)),
            pl.BlockSpec((BS, 2 * DEC_DIM), cmap),    # resident carried state
        ),
        scratch_shapes=[pltpu.VMEM((BS, L, ATTN_DIM), jnp.float32)],
    )

    flops_step = 2 * BS * (EMB_DIM * EMB_DIM
                           + DEC_DIM * (ATTN_DIM + 4 * DEC_DIM)
                           + (EMB_DIM + ENC_DIM) * DEC_DIM
                           + DEC_DIM * 4 * DEC_DIM
                           + DEC_DIM * N_CLASS)
    cost = pl.CostEstimate(
        flops=int(num_steps * flops_step + 2 * BS * L * ENC_DIM * ATTN_DIM),
        transcendentals=int(num_steps * BS * (L * ATTN_DIM + 2 * L
                                              + 5 * DEC_DIM + 2 * N_CLASS)),
        bytes_accessed=int(4 * (EMB_DIM * WA_COLS
                                + (EMB_DIM + ENC_DIM) * DEC_DIM + B_COLS
                                + BS * L * ENC_DIM + 4 * BS * DEC_DIM
                                + num_steps * BS * (N_CLASS + 1))),
    )

    logp, state = pl.pallas_call(
        decoder_steps_kernel,
        grid_spec=grid_spec,
        out_shape=(jax.ShapeDtypeStruct((num_steps, BS, N_CLASS), jnp.float32),
                   jax.ShapeDtypeStruct((BS, 2 * DEC_DIM), jnp.float32)),
        compiler_params=pltpu.CompilerParams(
            dimension_semantics=("arbitrary",)),     # true recurrence over steps
        cost_estimate=cost,
    )(tok_flat, v_t, hc, packed["wa"], packed["catw"], packed["brow"])
    return logp, state


@jax.jit
def decoder_forward(packed, y, encoder_out, h, c):
    """Exact Decoder.forward: single step, uses only y[:, -1]."""
    hc = jnp.concatenate([h, c], axis=1)
    tokens = y[:, -1].astype(jnp.int32)[None, :]                 # (1, BS)
    logp, state = _decode_steps(packed, tokens, encoder_out, hc)
    out = jnp.transpose(logp, (1, 0, 2))                         # (BS, 1, N_CLASS)
    return out, (state[:, :DEC_DIM], state[:, DEC_DIM:])


@jax.jit
def decoder_decode(packed, y, encoder_out, h, c):
    """Teacher-forced T-step decode fused into ONE pallas_call; step t
    reproduces Decoder.forward(y[:, :t+1], encoder_out, (h, c))."""
    hc = jnp.concatenate([h, c], axis=1)
    tokens = jnp.transpose(y.astype(jnp.int32))                  # (T, BS)
    logp, state = _decode_steps(packed, tokens, encoder_out, hc)
    return jnp.transpose(logp, (1, 0, 2)), (state[:, :DEC_DIM], state[:, DEC_DIM:])


# ---- pure-JAX references (same math, unpacked params) ---------------------------
def decoder_forward_ref(params, y, encoder_out, h, c):
    bs, enc_dim, w, hh = encoder_out.shape
    V = jnp.transpose(encoder_out.reshape(bs, enc_dim, w * hh), (0, 2, 1))
    embed = params["emb_w"][y[:, -1]]
    enc_p = jnp.einsum("ble,ae->bla", V, params["ae_w"]) + params["ae_b"]
    dec_p = h @ params["ad_w"].T + params["ad_b"]
    e = jnp.tanh(enc_p + dec_p[:, None, :])
    scores = jnp.einsum("bla,ca->blc", e, params["af_w"])[:, :, 0] + params["af_b"][0, 0]
    alpha = jax.nn.softmax(scores, axis=-1)
    context = jnp.einsum("bl,ble->be", alpha, V)
    x = jnp.concatenate([embed, context], axis=1)
    rnn_in = x @ params["cat_w"].T + params["cat_b"]
    gates = rnn_in @ params["w_ih"].T + params["b_ih"] + h @ params["w_hh"].T + params["b_hh"]
    i_g = jax.nn.sigmoid(gates[:, :DEC_DIM])
    f_g = jax.nn.sigmoid(gates[:, DEC_DIM:2 * DEC_DIM])
    g_g = jnp.tanh(gates[:, 2 * DEC_DIM:3 * DEC_DIM])
    o_g = jax.nn.sigmoid(gates[:, 3 * DEC_DIM:])
    c_new = f_g * c + i_g * g_g
    h_new = o_g * jnp.tanh(c_new)
    logits = h_new @ params["out_w"].T + params["out_b"]
    logp = jax.nn.log_softmax(logits, axis=-1)
    return logp[:, None, :], (h_new, c_new)


def decoder_decode_ref(params, y, encoder_out, h, c):
    outs = []
    for t in range(y.shape[1]):
        logp, (h, c) = decoder_forward_ref(params, y[:, :t + 1], encoder_out, h, c)
        outs.append(logp[:, 0])
    return jnp.stack(outs, axis=1), (h, c)


def init_params(key):
    ks = jax.random.split(key, 12)
    ortho = jax.nn.initializers.orthogonal()

    def lin(k, out_d, in_d):
        bound = 1.0 / jnp.sqrt(in_d)
        kw, kb = jax.random.split(k)
        w = jax.random.uniform(kw, (out_d, in_d), jnp.float32, -bound, bound)
        b = jax.random.uniform(kb, (1, out_d), jnp.float32, -bound, bound)
        return w, b

    p = {}
    p["emb_w"] = ortho(ks[0], (N_CLASS, EMB_DIM), jnp.float32)        # orthogonal, per init_weights
    p["ae_w"], p["ae_b"] = lin(ks[1], ATTN_DIM, ENC_DIM)
    p["ad_w"], p["ad_b"] = lin(ks[2], ATTN_DIM, DEC_DIM)
    p["af_w"], p["af_b"] = lin(ks[3], 1, ATTN_DIM)
    p["cat_w"], p["cat_b"] = lin(ks[4], DEC_DIM, EMB_DIM + ENC_DIM)
    p["w_ih"] = ortho(ks[5], (4 * DEC_DIM, DEC_DIM), jnp.float32)     # orthogonal LSTM weights
    p["w_hh"] = ortho(ks[6], (4 * DEC_DIM, DEC_DIM), jnp.float32)
    bound = 1.0 / jnp.sqrt(DEC_DIM)
    p["b_ih"] = jax.random.uniform(ks[7], (1, 4 * DEC_DIM), jnp.float32, -bound, bound)
    p["b_hh"] = jax.random.uniform(ks[8], (1, 4 * DEC_DIM), jnp.float32, -bound, bound)
    p["out_w"], p["out_b"] = lin(ks[9], N_CLASS, DEC_DIM)
    return p


if __name__ == "__main__":
    key = jax.random.PRNGKey(0)
    kp, ky, kv, kh, kc = jax.random.split(key, 5)

    params = init_params(kp)
    packed = pack_params(params)       # one-time repack into 3 DMA slabs

    y = jax.random.randint(ky, (BS, T), 0, N_CLASS, dtype=jnp.int32)
    encoder_out = jax.random.normal(kv, (BS, ENC_DIM, W_SP, H_SP), jnp.float32)
    h0 = jax.random.normal(kh, (BS, DEC_DIM), jnp.float32)
    c0 = jax.random.normal(kc, (BS, DEC_DIM), jnp.float32)

    # 1) single step: exact Decoder.forward semantics
    logp, (h1, c1) = decoder_forward(packed, y, encoder_out, h0, c0)
    jax.block_until_ready((logp, h1, c1))
    logp_r, (h1_r, c1_r) = decoder_forward_ref(params, y, encoder_out, h0, c0)
    assert logp.shape == (BS, 1, N_CLASS) and h1.shape == (BS, DEC_DIM) and c1.shape == (BS, DEC_DIM)
    assert jnp.allclose(logp, logp_r, atol=2e-3, rtol=2e-3)
    assert jnp.allclose(h1, h1_r, atol=2e-3, rtol=2e-3)
    assert jnp.allclose(c1, c1_r, atol=2e-3, rtol=2e-3)

    # 2) fused T-step teacher-forced decode loop (the perf path): one pallas_call
    logp_seq, (hT, cT) = decoder_decode(packed, y, encoder_out, h0, c0)
    jax.block_until_ready((logp_seq, hT, cT))
    logp_seq_r, (hT_r, cT_r) = decoder_decode_ref(params, y, encoder_out, h0, c0)
    assert logp_seq.shape == (BS, T, N_CLASS)
    assert jnp.allclose(logp_seq, logp_seq_r, atol=2e-3, rtol=2e-3)
    assert jnp.allclose(hT, hT_r, atol=2e-3, rtol=2e-3)
    assert jnp.allclose(cT, cT_r, atol=2e-3, rtol=2e-3)

    print("KERNEL_OK")
</pallas_src>

<mosaic_0001>
module attributes {stable_mosaic.version = 11 : i64} {
  func.func @decoder_steps_kernel(%arg0: i32, %arg1: memref<2xi32, #tpu.memory_space<smem>>, %arg2: memref<2x16x128xf32, #tpu.memory_space<vmem>>, %arg3: memref<2x256xf32, #tpu.memory_space<vmem>>, %arg4: memref<128x1536xf32, #tpu.memory_space<vmem>>, %arg5: memref<256x128xf32, #tpu.memory_space<vmem>>, %arg6: memref<1x1024xf32, #tpu.memory_space<vmem>>, %arg7: memref<1x2x128xf32, #tpu.memory_space<vmem>>, %arg8: memref<2x256xf32, #tpu.memory_space<vmem>>, %arg9: memref<2x16x128xf32, #tpu.memory_space<vmem>>) attributes {dimension_semantics = [#tpu.dimension_semantics<arbitrary>], iteration_bounds = array<i64: 1>, scalar_prefetch = 1 : i64, scratch_operands = 1 : i64, tpu.core_type = #tpu.core_type<tc>, window_params = [{pipeline_mode = #tpu.pipeline_mode<synchronous>, transform_indices = @transform_0, window_bounds = array<i64: 2, 16, 128>}, {pipeline_mode = #tpu.pipeline_mode<synchronous>, transform_indices = @transform_1, window_bounds = array<i64: 2, 256>}, {pipeline_mode = #tpu.pipeline_mode<synchronous>, transform_indices = @transform_2, window_bounds = array<i64: 128, 1536>}, {pipeline_mode = #tpu.pipeline_mode<synchronous>, transform_indices = @transform_3, window_bounds = array<i64: 256, 128>}, {pipeline_mode = #tpu.pipeline_mode<synchronous>, transform_indices = @transform_4, window_bounds = array<i64: 1, 1024>}, {transform_indices = @transform_5, window_bounds = array<i64: 1, 2, 128>}, {pipeline_mode = #tpu.pipeline_mode<synchronous>, transform_indices = @transform_6, window_bounds = array<i64: 2, 256>}]} {
    %c0_i32 = arith.constant 0 : i32
    %0 = arith.cmpi eq, %arg0, %c0_i32 : i32
    %1 = arith.extui %0 : i1 to i32
    %c0_i32_0 = arith.constant 0 : i32
    %2 = arith.cmpi ne, %1, %c0_i32_0 : i32
    scf.if %2 {
      %c0_48 = arith.constant 0 : index
      %c0_49 = arith.constant 0 : index
      %113 = vector.load %arg3[%c0_48, %c0_49] : memref<2x256xf32, #tpu.memory_space<vmem>>, vector<2x256xf32>
      %c0_50 = arith.constant 0 : index
      %c0_51 = arith.constant 0 : index
      %114 = vector.load %arg8[%c0_50, %c0_51] : memref<2x256xf32, #tpu.memory_space<vmem>>, vector<2x256xf32>
      tpu.vector_store %arg8[%c0_50, %c0_51], %113 {strides = array<i32>} : memref<2x256xf32, #tpu.memory_space<vmem>>, vector<2x256xf32>,
      %c0_52 = arith.constant 0 : index
      %c0_53 = arith.constant 0 : index
      %c0_54 = arith.constant 0 : index
      %115 = vector.load %arg2[%c0_52, %c0_53, %c0_54] : memref<2x16x128xf32, #tpu.memory_space<vmem>>, vector<2x16x128xf32>
      %116 = vector.shape_cast %115 : vector<2x16x128xf32> to vector<32x128xf32>
      %c0_55 = arith.constant 0 : index
      %c128_56 = arith.constant 128 : index
      %117 = vector.load %arg4[%c0_55, %c128_56] : memref<128x1536xf32, #tpu.memory_space<vmem>>, vector<128x128xf32>
      %cst_57 = arith.constant dense<0.000000e+00> : vector<32x128xf32>
      %118 = tpu.matmul %116, %117, %cst_57 {dimension_numbers = #tpu.dot_dimension_numbers<[1], [0], [0], [1], [0, 0, 1, 1], [], []>} : vector<32x128xf32>, vector<128x128xf32>, vector<32x128xf32> -> vector<32x128xf32>
      %c0_58 = arith.constant 0 : index
      %c0_59 = arith.constant 0 : index
      %119 = vector.load %arg6[%c0_58, %c0_59] : memref<1x1024xf32, #tpu.memory_space<vmem>>, vector<1x128xf32>
      %120 = vector.broadcast %119 : vector<1x128xf32> to vector<32x128xf32>
      %121 = arith.addf %118, %120 : vector<32x128xf32>
      %122 = vector.shape_cast %121 : vector<32x128xf32> to vector<2x16x128xf32>
      %c0_60 = arith.constant 0 : index
      %c0_61 = arith.constant 0 : index
      %c0_62 = arith.constant 0 : index
      %123 = vector.load %arg9[%c0_60, %c0_61, %c0_62] : memref<2x16x128xf32, #tpu.memory_space<vmem>>, vector<2x16x128xf32>
      tpu.vector_store %arg9[%c0_60, %c0_61, %c0_62], %122 {strides = array<i32>} : memref<2x16x128xf32, #tpu.memory_space<vmem>>, vector<2x16x128xf32>,
    } else {
    }
    %c0 = arith.constant 0 : index
    %c0_1 = arith.constant 0 : index
    %3 = vector.load %arg8[%c0, %c0_1] : memref<2x256xf32, #tpu.memory_space<vmem>>, vector<2x128xf32>
    %c0_2 = arith.constant 0 : index
    %c128 = arith.constant 128 : index
    %4 = vector.load %arg8[%c0_2, %c128] : memref<2x256xf32, #tpu.memory_space<vmem>>, vector<2x128xf32>
    %5 = tpu.iota {dimensions = array<i32: 1>} : vector<2x128xi32>
    %6 = tpu.iota {dimensions = array<i32: 0>} : vector<2x128xi32>
    %c0_i32_3 = arith.constant 0 : i32
    %7 = vector.broadcast %c0_i32_3 : i32 to vector<2x128xi32>
    %c0_i32_4 = arith.constant 0 : i32
    %8 = vector.broadcast %c0_i32_4 : i32 to vector<2x128xi32>
    %9 = arith.cmpi eq, %6, %8 : vector<2x128xi32>
    %c2_i32 = arith.constant 2 : i32
    %10 = arith.muli %arg0, %c2_i32 : i32
    %c0_i32_5 = arith.constant 0 : i32
    %11 = arith.addi %10, %c0_i32_5 : i32
    %12 = arith.index_cast %11 : i32 to index
    %13 = memref.load %arg1[%12] : memref<2xi32, #tpu.memory_space<smem>>
    %14 = vector.broadcast %13 : i32 to vector<2x128xi32>
    %15 = arith.select %9, %14, %7 : vector<2x128xi1>, vector<2x128xi32>
    %c1_i32 = arith.constant 1 : i32
    %16 = vector.broadcast %c1_i32 : i32 to vector<2x128xi32>
    %17 = arith.cmpi eq, %6, %16 : vector<2x128xi32>
    %c2_i32_6 = arith.constant 2 : i32
    %18 = arith.muli %arg0, %c2_i32_6 : i32
    %c1_i32_7 = arith.constant 1 : i32
    %19 = arith.addi %18, %c1_i32_7 : i32
    %20 = arith.index_cast %19 : i32 to index
    %21 = memref.load %arg1[%20] : memref<2xi32, #tpu.memory_space<smem>>
    %22 = vector.broadcast %21 : i32 to vector<2x128xi32>
    %23 = arith.select %17, %22, %15 : vector<2x128xi1>, vector<2x128xi32>
    %24 = arith.cmpi eq, %5, %23 : vector<2x128xi32>
    %25 = arith.extui %24 : vector<2x128xi1> to vector<2x128xi32>
    %26 = arith.sitofp %25 : vector<2x128xi32> to vector<2x128xf32>
    %c0_8 = arith.constant 0 : index
    %c0_9 = arith.constant 0 : index
    %27 = vector.load %arg4[%c0_8, %c0_9] : memref<128x1536xf32, #tpu.memory_space<vmem>>, vector<128x128xf32>
    %cst = arith.constant dense<0.000000e+00> : vector<2x128xf32>
    %28 = tpu.matmul %26, %27, %cst {dimension_numbers = #tpu.dot_dimension_numbers<[1], [0], [0], [1], [0, 0, 1, 1], [], []>} : vector<2x128xf32>, vector<128x128xf32>, vector<2x128xf32> -> vector<2x128xf32>
    %c0_10 = arith.constant 0 : index
    %c256 = arith.constant 256 : index
    %29 = vector.load %arg4[%c0_10, %c256] : memref<128x1536xf32, #tpu.memory_space<vmem>>, vector<128x640xf32>
    %cst_11 = arith.constant dense<0.000000e+00> : vector<2x640xf32>
    %30 = tpu.matmul %3, %29, %cst_11 {dimension_numbers = #tpu.dot_dimension_numbers<[1], [0], [0], [1], [0, 0, 1, 1], [], []>} : vector<2x128xf32>, vector<128x640xf32>, vector<2x640xf32> -> vector<2x640xf32>
    %31 = vector.extract_strided_slice %30 {offsets = [0, 0], sizes = [2, 128], strides = [1, 1]} : vector<2x640xf32> to vector<2x128xf32>
    %32 = vector.extract_strided_slice %30 {offsets = [0, 128], sizes = [2, 512], strides = [1, 1]} : vector<2x640xf32> to vector<2x512xf32>
    %c0_12 = arith.constant 0 : index
    %c0_13 = arith.constant 0 : index
    %c0_14 = arith.constant 0 : index
    %33 = vector.load %arg9[%c0_12, %c0_13, %c0_14] : memref<2x16x128xf32, #tpu.memory_space<vmem>>, vector<2x16x128xf32>
    %34 = vector.shape_cast %31 : vector<2x128xf32> to vector<2x1x128xf32>
    %35 = vector.broadcast %34 : vector<2x1x128xf32> to vector<2x16x128xf32>
    %36 = arith.addf %33, %35 : vector<2x16x128xf32>
    %37 = math.tanh %36 : vector<2x16x128xf32>
    %c0_15 = arith.constant 0 : index
    %c128_16 = arith.constant 128 : index
    %38 = vector.load %arg6[%c0_15, %c128_16] : memref<1x1024xf32, #tpu.memory_space<vmem>>, vector<1x128xf32>
    %39 = vector.shape_cast %38 : vector<1x128xf32> to vector<1x1x128xf32>
    %40 = vector.broadcast %39 : vector<1x1x128xf32> to vector<2x16x128xf32>
    %41 = arith.mulf %37, %40 : vector<2x16x128xf32>
    %cst_17 = arith.constant dense<0.000000e+00> : vector<2x16xf32>
    %42 = vector.multi_reduction <add>, %41, %cst_17 [2] : vector<2x16x128xf32> to vector<2x16xf32>
    %43 = vector.shape_cast %42 : vector<2x16xf32> to vector<2x16x1xf32>
    %cst_18 = arith.constant dense<0xFF800000> : vector<2x1xf32>
    %44 = vector.multi_reduction <maximumf>, %43, %cst_18 [1] : vector<2x16x1xf32> to vector<2x1xf32>
    %45 = vector.shape_cast %44 : vector<2x1xf32> to vector<2x1x1xf32>
    %46 = vector.broadcast %45 : vector<2x1x1xf32> to vector<2x16x1xf32>
    %47 = arith.subf %43, %46 : vector<2x16x1xf32>
    %48 = math.exp %47 : vector<2x16x1xf32>
    %cst_19 = arith.constant dense<0.000000e+00> : vector<2x1xf32>
    %49 = vector.multi_reduction <add>, %48, %cst_19 [1] : vector<2x16x1xf32> to vector<2x1xf32>
    %50 = vector.shape_cast %49 : vector<2x1xf32> to vector<2x1x1xf32>
    %51 = vector.broadcast %50 : vector<2x1x1xf32> to vector<2x16x1xf32>
    %52 = arith.divf %48, %51 : vector<2x16x1xf32>
    %c0_20 = arith.constant 0 : index
    %c0_21 = arith.constant 0 : index
    %c0_22 = arith.constant 0 : index
    %53 = vector.load %arg2[%c0_20, %c0_21, %c0_22] : memref<2x16x128xf32, #tpu.memory_space<vmem>>, vector<2x16x128xf32>
    %54 = vector.broadcast %52 : vector<2x16x1xf32> to vector<2x16x128xf32>
    %55 = arith.mulf %54, %53 : vector<2x16x128xf32>
    %cst_23 = arith.constant dense<0.000000e+00> : vector<2x128xf32>
    %56 = vector.multi_reduction <add>, %55, %cst_23 [1] : vector<2x16x128xf32> to vector<2x128xf32>
    %57 = tpu.concatenate %28, %56 in 1 : vector<2x128xf32>, vector<2x128xf32> -> vector<2x256xf32>
    %c0_24 = arith.constant 0 : index
    %c0_25 = arith.constant 0 : index
    %58 = vector.load %arg5[%c0_24, %c0_25] : memref<256x128xf32, #tpu.memory_space<vmem>>, vector<256x128xf32>
    %cst_26 = arith.constant dense<0.000000e+00> : vector<2x128xf32>
    %59 = tpu.matmul %57, %58, %cst_26 {dimension_numbers = #tpu.dot_dimension_numbers<[1], [0], [0], [1], [0, 0, 1, 1], [], []>} : vector<2x256xf32>, vector<256x128xf32>, vector<2x128xf32> -> vector<2x128xf32>
    %c0_27 = arith.constant 0 : index
    %c256_28 = arith.constant 256 : index
    %60 = vector.load %arg6[%c0_27, %c256_28] : memref<1x1024xf32, #tpu.memory_space<vmem>>, vector<1x128xf32>
    %61 = vector.broadcast %60 : vector<1x128xf32> to vector<2x128xf32>
    %62 = arith.addf %59, %61 : vector<2x128xf32>
    %c0_29 = arith.constant 0 : index
    %c896 = arith.constant 896 : index
    %63 = vector.load %arg4[%c0_29, %c896] : memref<128x1536xf32, #tpu.memory_space<vmem>>, vector<128x512xf32>
    %cst_30 = arith.constant dense<0.000000e+00> : vector<2x512xf32>
    %64 = tpu.matmul %62, %63, %cst_30 {dimension_numbers = #tpu.dot_dimension_numbers<[1], [0], [0], [1], [0, 0, 1, 1], [], []>} : vector<2x128xf32>, vector<128x512xf32>, vector<2x512xf32> -> vector<2x512xf32>
    %65 = arith.addf %64, %32 : vector<2x512xf32>
    %c0_31 = arith.constant 0 : index
    %c384 = arith.constant 384 : index
    %66 = vector.load %arg6[%c0_31, %c384] : memref<1x1024xf32, #tpu.memory_space<vmem>>, vector<1x512xf32>
    %67 = vector.broadcast %66 : vector<1x512xf32> to vector<2x512xf32>
    %68 = arith.addf %65, %67 : vector<2x512xf32>
    %69 = vector.extract_strided_slice %68 {offsets = [0, 0], sizes = [2, 128], strides = [1, 1]} : vector<2x512xf32> to vector<2x128xf32>
    %70 = arith.negf %69 : vector<2x128xf32>
    %71 = math.exp %70 : vector<2x128xf32>
    %cst_32 = arith.constant 1.000000e+00 : f32
    %72 = vector.broadcast %cst_32 : f32 to vector<2x128xf32>
    %73 = arith.addf %72, %71 : vector<2x128xf32>
    %74 = arith.divf %72, %73 : vector<2x128xf32>
    %75 = vector.extract_strided_slice %68 {offsets = [0, 128], sizes = [2, 128], strides = [1, 1]} : vector<2x512xf32> to vector<2x128xf32>
    %76 = arith.negf %75 : vector<2x128xf32>
    %77 = math.exp %76 : vector<2x128xf32>
    %cst_33 = arith.constant 1.000000e+00 : f32
    %78 = vector.broadcast %cst_33 : f32 to vector<2x128xf32>
    %79 = arith.addf %78, %77 : vector<2x128xf32>
    %80 = arith.divf %78, %79 : vector<2x128xf32>
    %81 = vector.extract_strided_slice %68 {offsets = [0, 256], sizes = [2, 128], strides = [1, 1]} : vector<2x512xf32> to vector<2x128xf32>
    %82 = math.tanh %81 : vector<2x128xf32>
    %83 = vector.extract_strided_slice %68 {offsets = [0, 384], sizes = [2, 128], strides = [1, 1]} : vector<2x512xf32> to vector<2x128xf32>
    %84 = arith.negf %83 : vector<2x128xf32>
    %85 = math.exp %84 : vector<2x128xf32>
    %cst_34 = arith.constant 1.000000e+00 : f32
    %86 = vector.broadcast %cst_34 : f32 to vector<2x128xf32>
    %87 = arith.addf %86, %85 : vector<2x128xf32>
    %88 = arith.divf %86, %87 : vector<2x128xf32>
    %89 = arith.mulf %80, %4 : vector<2x128xf32>
    %90 = arith.mulf %74, %82 : vector<2x128xf32>
    %91 = arith.addf %89, %90 : vector<2x128xf32>
    %92 = math.tanh %91 : vector<2x128xf32>
    %93 = arith.mulf %88, %92 : vector<2x128xf32>
    %c0_35 = arith.constant 0 : index
    %c1408 = arith.constant 1408 : index
    %94 = vector.load %arg4[%c0_35, %c1408] : memref<128x1536xf32, #tpu.memory_space<vmem>>, vector<128x128xf32>
    %cst_36 = arith.constant dense<0.000000e+00> : vector<2x128xf32>
    %95 = tpu.matmul %93, %94, %cst_36 {dimension_numbers = #tpu.dot_dimension_numbers<[1], [0], [0], [1], [0, 0, 1, 1], [], []>} : vector<2x128xf32>, vector<128x128xf32>, vector<2x128xf32> -> vector<2x128xf32>
    %c0_37 = arith.constant 0 : index
    %c896_38 = arith.constant 896 : index
    %96 = vector.load %arg6[%c0_37, %c896_38] : memref<1x1024xf32, #tpu.memory_space<vmem>>, vector<1x128xf32>
    %97 = vector.broadcast %96 : vector<1x128xf32> to vector<2x128xf32>
    %98 = arith.addf %95, %97 : vector<2x128xf32>
    %cst_39 = arith.constant dense<0xFF800000> : vector<2xf32>
    %99 = vector.multi_reduction <maximumf>, %98, %cst_39 [1] : vector<2x128xf32> to vector<2xf32>
    %100 = vector.shape_cast %99 : vector<2xf32> to vector<2x1xf32>
    %101 = vector.broadcast %100 : vector<2x1xf32> to vector<2x128xf32>
    %102 = arith.subf %98, %101 : vector<2x128xf32>
    %103 = math.exp %102 : vector<2x128xf32>
    %cst_40 = arith.constant dense<0.000000e+00> : vector<2xf32>
    %104 = vector.multi_reduction <add>, %103, %cst_40 [1] : vector<2x128xf32> to vector<2xf32>
    %105 = vector.shape_cast %104 : vector<2xf32> to vector<2x1xf32>
    %106 = math.log %105 : vector<2x1xf32>
    %107 = vector.broadcast %106 : vector<2x1xf32> to vector<2x128xf32>
    %108 = arith.subf %102, %107 : vector<2x128xf32>
    %109 = vector.shape_cast %108 : vector<2x128xf32> to vector<1x2x128xf32>
    %c0_41 = arith.constant 0 : index
    %c0_42 = arith.constant 0 : index
    %c0_43 = arith.constant 0 : index
    %110 = vector.load %arg7[%c0_41, %c0_42, %c0_43] : memref<1x2x128xf32, #tpu.memory_space<vmem>>, vector<1x2x128xf32>
    tpu.vector_store %arg7[%c0_41, %c0_42, %c0_43], %109 {strides = array<i32>} : memref<1x2x128xf32, #tpu.memory_space<vmem>>, vector<1x2x128xf32>,
    %c0_44 = arith.constant 0 : index
    %c0_45 = arith.constant 0 : index
    %111 = vector.load %arg8[%c0_44, %c0_45] : memref<2x256xf32, #tpu.memory_space<vmem>>, vector<2x128xf32>
    tpu.vector_store %arg8[%c0_44, %c0_45], %93 {strides = array<i32>} : memref<2x256xf32, #tpu.memory_space<vmem>>, vector<2x128xf32>,
    %c0_46 = arith.constant 0 : index
    %c128_47 = arith.constant 128 : index
    %112 = vector.load %arg8[%c0_46, %c128_47] : memref<2x256xf32, #tpu.memory_space<vmem>>, vector<2x128xf32>
    tpu.vector_store %arg8[%c0_46, %c128_47], %91 {strides = array<i32>} : memref<2x256xf32, #tpu.memory_space<vmem>>, vector<2x128xf32>,
    return
  }
  func.func @transform_0(%arg0: i32, %arg1: memref<2xi32, #tpu.memory_space<smem>>) -> (i32, i32, i32) {
    %c0_i32 = arith.constant 0 : i32
    %c0_i32_0 = arith.constant 0 : i32
    %c0_i32_1 = arith.constant 0 : i32
    %c0_i32_2 = arith.constant 0 : i32
    return %c0_i32, %c0_i32_0, %c0_i32_1 : i32, i32, i32
  }
  func.func @transform_1(%arg0: i32, %arg1: memref<2xi32, #tpu.memory_space<smem>>) -> (i32, i32) {
    %c0_i32 = arith.constant 0 : i32
    %c0_i32_0 = arith.constant 0 : i32
    %c0_i32_1 = arith.constant 0 : i32
    return %c0_i32, %c0_i32_0 : i32, i32
  }
  func.func @transform_2(%arg0: i32, %arg1: memref<2xi32, #tpu.memory_space<smem>>) -> (i32, i32) {
    %c0_i32 = arith.constant 0 : i32
    %c0_i32_0 = arith.constant 0 : i32
    %c0_i32_1 = arith.constant 0 : i32
    return %c0_i32, %c0_i32_0 : i32, i32
  }
  func.func @transform_3(%arg0: i32, %arg1: memref<2xi32, #tpu.memory_space<smem>>) -> (i32, i32) {
    %c0_i32 = arith.constant 0 : i32
    %c0_i32_0 = arith.constant 0 : i32
    %c0_i32_1 = arith.constant 0 : i32
    return %c0_i32, %c0_i32_0 : i32, i32
  }
  func.func @transform_4(%arg0: i32, %arg1: memref<2xi32, #tpu.memory_space<smem>>) -> (i32, i32) {
    %c0_i32 = arith.constant 0 : i32
    %c0_i32_0 = arith.constant 0 : i32
    %c0_i32_1 = arith.constant 0 : i32
    return %c0_i32, %c0_i32_0 : i32, i32
  }
  func.func @transform_5(%arg0: i32, %arg1: memref<2xi32, #tpu.memory_space<smem>>) -> (i32, i32, i32) {
    %c0_i32 = arith.constant 0 : i32
    %c0_i32_0 = arith.constant 0 : i32
    %c0_i32_1 = arith.constant 0 : i32
    return %arg0, %c0_i32, %c0_i32_0 : i32, i32, i32
  }
  func.func @transform_6(%arg0: i32, %arg1: memref<2xi32, #tpu.memory_space<smem>>) -> (i32, i32) {
    %c0_i32 = arith.constant 0 : i32
    %c0_i32_0 = arith.constant 0 : i32
    %c0_i32_1 = arith.constant 0 : i32
    return %c0_i32, %c0_i32_0 : i32, i32
  }
}

</mosaic_0001>

<llo_original>
// kernel: decoder_forward.1
$region0: #{decoder_forward.1}
  #allocation0 [shape = 'u32[]', space=smem, size = 0x4, offset = 0x4, fixed_abs, tag = 'smem constant byte address 0x4 - core index']
  #allocation1 [shape = 'u32[72,128]{1,0:T(1,128)}', space=vmem, size = 0x9000, scoped, tag = 'internal scratch']
  #allocation2 [shape = 'f32[2,16,128]{2,1,0:T(8,128)}', space=vmem, size = 0x4000, scoped, tag = 'scratch operand']
  #allocation3 [shape = 's32[1]{0}', space=sflag, size = 0x4, scoped, tag = 'scoped memory for decoder_forward.1']
  #allocation4 [shape = 'u8[512]{0}', space=smem, size = 0x200, scoped, tag = 'prefetched SMEM operand 0']
  %s0 = inlined_call_operand.vmem [shape: s32[2], index: 0, kind: input, shape index: {}]
  %s1 = inlined_call_operand.hbm [shape: f32[2,16,128], index: 1, kind: input, shape index: {}]
  %s2 = inlined_call_operand.vmem [shape: f32[2,256], index: 2, kind: input, shape index: {}]
  %s3 = inlined_call_operand.hbm [shape: f32[128,1536], index: 3, kind: input, shape index: {}]
  %s4 = inlined_call_operand.hbm [shape: f32[256,128], index: 4, kind: input, shape index: {}]
  %s5 = inlined_call_operand.vmem [shape: f32[1,1024], index: 5, kind: input, shape index: {}]
  %s6 = inlined_call_operand.hbm [shape: f32[1,2,128], index: 6, kind: output, shape index: {0}]
  %s7 = inlined_call_operand.vmem [shape: f32[2,256], index: 7, kind: output, shape index: {1}]
  %8 = xla_tuple %s6, %s7
  %s9 = sld [smem:[#allocation0]]
  $region54: #{decoder_forward.1} parent=0
    _
  %s11 = ssub.s32 1, %s9
  %s12 = scalar_select 0, %s11, %s9
  %s14 = sshll.u32 %s0, 4
  %s15 = int_to_ptr.vmem [resolvable:$true] %s14
  %17 = dma.vmem_to_smem %s15, 16, [#allocation4], [#allocation3]
  %19 = dma.done [#allocation3], 16
  %20 = sfence
  $region1: #{decoder_forward.1} parent=0
    #allocation5 [shape = 'u8[16384]{0}', space=vmem, size = 0x4000, scoped, tag = 'input window, operand 1, single buffered']
    #allocation6 [shape = 's32[1]{0}', space=sflag, size = 0x4, scoped, tag = 'scoped memory for decoder_forward.1']
    #allocation7 [shape = 's32[1]{0}', space=sflag, size = 0x4, scoped, tag = 'scoped memory for decoder_forward.1']
    #allocation8 [shape = 'u8[786432]{0}', space=vmem, size = 0xc0000, scoped, tag = 'input window, operand 3, single buffered']
    #allocation9 [shape = 's32[1]{0}', space=sflag, size = 0x4, scoped, tag = 'scoped memory for decoder_forward.1']
    #allocation10 [shape = 'u8[131072]{0}', space=vmem, size = 0x20000, scoped, tag = 'input window, operand 4, single buffered']
    #allocation11 [shape = 'u8[1024]{0}', space=vmem, size = 0x400, scoped, tag = 'output window, operand 0, single buffered']
    %21 = vsyncpa [#allocation6], 0
    %22 = vsyncpa [#allocation9], 0
    %23 = vsyncpa [#allocation7], 0
    // Predicated region
    $region2: #{decoder_forward.1} parent=1 // pred_check
      _
    $region3: #{decoder_forward.1} parent=1 // pred_check_branch
      %25 = sbr.rel (0) target = $region5
    $region4: #{decoder_forward.1} parent=1 // pred_region
      %27 = vsyncadd [#allocation6], 0
      %s28 = sshll.u32 %s1, 4
      %s29 = int_to_ptr.hbm [resolvable:$true] %s28
      %s30 = sshll.u32 [#allocation5], 4
      %s31 = int_to_ptr.vmem [resolvable:$true] %s30
      %36 = dma.hbm_to_vmem [thread:$0]  %s29, 512, %s31, [#allocation6], 128, 128, 8
    $region5: #{decoder_forward.1} parent=1 // pred_fallthru
      _
    // Predicated region
    $region6: #{decoder_forward.1} parent=1 // pred_check
      _
    $region7: #{decoder_forward.1} parent=1 // pred_check_branch
      %38 = sbr.rel (0) target = $region9
    $region8: #{decoder_forward.1} parent=1 // pred_region
      _
    $region9: #{decoder_forward.1} parent=1 // pred_fallthru
      _
    // Predicated region
    $region10: #{decoder_forward.1} parent=1 // pred_check
      _
    $region11: #{decoder_forward.1} parent=1 // pred_check_branch
      %40 = sbr.rel (0) target = $region13
    $region12: #{decoder_forward.1} parent=1 // pred_region
      %42 = vsyncadd [#allocation9], 0
      %s43 = sshll.u32 %s3, 4
      %s44 = int_to_ptr.hbm [resolvable:$true] %s43
      %s45 = sshll.u32 [#allocation8], 4
      %s46 = int_to_ptr.vmem [resolvable:$true] %s45
      %51 = dma.hbm_to_vmem [thread:$0]  %s44, 24576, %s46, [#allocation9], 1536, 1536, 96
    $region13: #{decoder_forward.1} parent=1 // pred_fallthru
      _
    // Predicated region
    $region14: #{decoder_forward.1} parent=1 // pred_check
      _
    $region15: #{decoder_forward.1} parent=1 // pred_check_branch
      %53 = sbr.rel (0) target = $region17
    $region16: #{decoder_forward.1} parent=1 // pred_region
      %55 = vsyncadd [#allocation9], 0
      %s56 = sshll.u32 %s4, 4
      %s57 = int_to_ptr.hbm [resolvable:$true] %s56
      %s58 = sshll.u32 [#allocation10], 4
      %s59 = int_to_ptr.vmem [resolvable:$true] %s58
      %64 = dma.hbm_to_vmem [thread:$0]  %s57, 4096, %s59, [#allocation9], 128, 128, 8
    $region17: #{decoder_forward.1} parent=1 // pred_fallthru
      _
    // Predicated region
    $region18: #{decoder_forward.1} parent=1 // pred_check
      _
    $region19: #{decoder_forward.1} parent=1 // pred_check_branch
      %66 = sbr.rel (0) target = $region21
    $region20: #{decoder_forward.1} parent=1 // pred_region
      _
    $region21: #{decoder_forward.1} parent=1 // pred_fallthru
      _
    // Predicated region
    $region22: #{decoder_forward.1} parent=1 // pred_check
      _
    $region23: #{decoder_forward.1} parent=1 // pred_check_branch
      %68 = sbr.rel (0) target = $region25
    $region24: #{decoder_forward.1} parent=1 // pred_region
      %70 = dma.done [#allocation6], 512
    $region25: #{decoder_forward.1} parent=1 // pred_fallthru
      _
    // Predicated region
    $region26: #{decoder_forward.1} parent=1 // pred_check
      _
    $region27: #{decoder_forward.1} parent=1 // pred_check_branch
      %72 = sbr.rel (0) target = $region29
    $region28: #{decoder_forward.1} parent=1 // pred_region
      %74 = dma.done [#allocation9], 24576
    $region29: #{decoder_forward.1} parent=1 // pred_fallthru
      _
    // Predicated region
    $region30: #{decoder_forward.1} parent=1 // pred_check
      _
    $region31: #{decoder_forward.1} parent=1 // pred_check_branch
      %76 = sbr.rel (0) target = $region33
    $region32: #{decoder_forward.1} parent=1 // pred_region
      %78 = dma.done [#allocation9], 4096
    $region33: #{decoder_forward.1} parent=1 // pred_fallthru
      _
    %p79 = scmp.eq.s32.totalorder 0, 0
    // Predicated region
    $region34: #{decoder_forward.1} parent=1 // pred_check
      %p80 = pneg %p79
    $region35: #{decoder_forward.1} parent=1 // pred_check_branch
      %82 = sbr.rel (%p80) target = $region37
    $region36: #{decoder_forward.1} parent=1 // pred_region
      %v83 = vld [vmem:[%s2] sm:$0xf]
      %84 = vst [vmem:[%s7] sm:$0xf] %v83
      %v85 = vld [vmem:[#allocation5] sm:$0xff]
      %v86 = vld [vmem:[#allocation5 + $0x8] sm:$0xff]
      %v87 = vld [vmem:[#allocation5 + $0x10] sm:$0xff]
      %v88 = vld [vmem:[#allocation5 + $0x18] sm:$0xff]
      %v89 = vld [vmem:[#allocation8 + $0x8] sm:$0xff]
      %v90 = vld [vmem:[#allocation8 + $0x68] sm:$0xff]
      %v91 = vld [vmem:[#allocation8 + $0xc8] sm:$0xff]
      %v92 = vld [vmem:[#allocation8 + $0x128] sm:$0xff]
      %v93 = vld [vmem:[#allocation8 + $0x188] sm:$0xff]
      %v94 = vld [vmem:[#allocation8 + $0x1e8] sm:$0xff]
      %v95 = vld [vmem:[#allocation8 + $0x248] sm:$0xff]
      %v96 = vld [vmem:[#allocation8 + $0x2a8] sm:$0xff]
      %v97 = vld [vmem:[#allocation8 + $0x308] sm:$0xff]
      %v98 = vld [vmem:[#allocation8 + $0x368] sm:$0xff]
      %v99 = vld [vmem:[#allocation8 + $0x3c8] sm:$0xff]
      %v100 = vld [vmem:[#allocation8 + $0x428] sm:$0xff]
      %v101 = vld [vmem:[#allocation8 + $0x488] sm:$0xff]
      %v102 = vld [vmem:[#allocation8 + $0x4e8] sm:$0xff]
      %v103 = vld [vmem:[#allocation8 + $0x548] sm:$0xff]
      %v104 = vld [vmem:[#allocation8 + $0x5a8] sm:$0xff]
      %v105 = vld [vmem:[%s5] sm:$0x1]
      %v107 = vperm.slane %v105, 0
      %109 = vmatpush.msra.mxu0 %v104
      %110 = vmatpush.msra.mxu0 %v103
      %111 = vmatpush.msra.mxu0 %v102
      %112 = vmatpush.msra.mxu0 %v101
      %113 = vmatpush.msra.mxu0 %v100
      %114 = vmatpush.msra.mxu0 %v99
      %115 = vmatpush.msra.mxu0 %v98
      %116 = vmatpush.msra.mxu0 %v97
      %117 = vmatpush.msra.mxu0 %v96
      %118 = vmatpush.msra.mxu0 %v95
      %119 = vmatpush.msra.mxu0 %v94
      %120 = vmatpush.msra.mxu0 %v93
      %121 = vmatpush.msra.mxu0 %v92
      %122 = vmatpush.msra.mxu0 %v91
      %123 = vmatpush.msra.mxu0 %v90
      %124 = vmatpush.msra.mxu0 %v89
      %125 = vmatmul.f32.gmra.mxu0 %v85
      %v126 = vpop.f32.mrf.mxu0
      %v127 = vadd.f32 %v107, %v126
      %128 = vmatmul.f32.gmra.mxu0 %v86
      %v129 = vpop.f32.mrf.mxu0
      %v130 = vadd.f32 %v107, %v129
      %131 = vmatmul.f32.gmra.mxu0 %v87
      %v132 = vpop.f32.mrf.mxu0
      %v133 = vadd.f32 %v107, %v132
      %134 = vmatmul.f32.gmra.mxu0 %v88
      %v135 = vpop.f32.mrf.mxu0
      %v136 = vadd.f32 %v107, %v135
      %137 = vdwg.mxu0
      %138 = vst [vmem:[#allocation2] sm:$0xff] %v127
      %139 = vst [vmem:[#allocation2 + $0x8] sm:$0xff] %v130
      %140 = vst [vmem:[#allocation2 + $0x10] sm:$0xff] %v133
      %141 = vst [vmem:[#allocation2 + $0x18] sm:$0xff] %v136
    $region37: #{decoder_forward.1} parent=1 // pred_fallthru
      _
    %v142 = vld [vmem:[%s7] sm:$0x3]
    %v143 = vld [vmem:[%s7 + $0x2] sm:$0x3]
    %v144 = vlaneseq
    %v145 = vand.u32 %v144, 127
    %v146 = vlaneseq
    %v147 = vshrl.u32 %v146, 7
    %vm148 = vcmp.eq.s32.totalorder %v147, 0
    %s149 = smul.u32 0, 2
    %s150 = sld [smem:[#allocation4 + %s149]]
    %v151 = vstv %s150
    %v152 = vsel %vm148, %v151, 0
    %vm153 = vcmp.eq.s32.totalorder %v147, 1
    %s154 = sadd.s32 %s149, 1
    %s155 = sld [smem:[#allocation4 + %s154]]
    %v156 = vstv %s155
    %v157 = vsel %vm153, %v156, %v152
    %vm158 = vcmp.eq.s32.totalorder %v145, %v157
    %v159 = vsel %vm158, 1, 0
    %v160 = vcvt.s32.f32 %v159
    %v161 = vld [vmem:[#allocation8] sm:$0xff]
    %v162 = vld [vmem:[#allocation8 + $0x60] sm:$0xff]
    %v163 = vld [vmem:[#allocation8 + $0xc0] sm:$0xff]
    %v164 = vld [vmem:[#allocation8 + $0x120] sm:$0xff]
    %v165 = vld [vmem:[#allocation8 + $0x180] sm:$0xff]
    %v166 = vld [vmem:[#allocation8 + $0x1e0] sm:$0xff]
    %v167 = vld [vmem:[#allocation8 + $0x240] sm:$0xff]
    %v168 = vld [vmem:[#allocation8 + $0x2a0] sm:$0xff]
    %v169 = vld [vmem:[#allocation8 + $0x300] sm:$0xff]
    %v170 = vld [vmem:[#allocation8 + $0x360] sm:$0xff]
    %v171 = vld [vmem:[#allocation8 + $0x3c0] sm:$0xff]
    %v172 = vld [vmem:[#allocation8 + $0x420] sm:$0xff]
    %v173 = vld [vmem:[#allocation8 + $0x480] sm:$0xff]
    %v174 = vld [vmem:[#allocation8 + $0x4e0] sm:$0xff]
    %v175 = vld [vmem:[#allocation8 + $0x540] sm:$0xff]
    %v176 = vld [vmem:[#allocation8 + $0x5a0] sm:$0xff]
    %177 = vmatpush.msra.mxu0 %v176
    %178 = vmatpush.msra.mxu0 %v175
    %179 = vmatpush.msra.mxu0 %v174
    %180 = vmatpush.msra.mxu0 %v173
    %181 = vmatpush.msra.mxu0 %v172
    %182 = vmatpush.msra.mxu0 %v171
    %183 = vmatpush.msra.mxu0 %v170
    %184 = vmatpush.msra.mxu0 %v169
    %185 = vmatpush.msra.mxu0 %v168
    %186 = vmatpush.msra.mxu0 %v167
    %187 = vmatpush.msra.mxu0 %v166
    %188 = vmatpush.msra.mxu0 %v165
    %189 = vmatpush.msra.mxu0 %v164
    %190 = vmatpush.msra.mxu0 %v163
    %191 = vmatpush.msra.mxu0 %v162
    %192 = vmatpush.msra.mxu0 %v161
    %193 = vmatmul.f32.gmra.mxu0 %v160
    %v194 = vpop.f32.mrf.mxu0
    %v195 = vadd.f32 0.0, %v194
    %196 = vdwg.mxu0
    %v197 = vld [vmem:[#allocation8 + $0x10] sm:$0xff]
    %v198 = vld [vmem:[#allocation8 + $0x18] sm:$0xff]
    %v199 = vld [vmem:[#allocation8 + $0x20] sm:$0xff]
    %v200 = vld [vmem:[#allocation8 + $0x28] sm:$0xff]
    %v201 = vld [vmem:[#allocation8 + $0x30] sm:$0xff]
    %v202 = vld [vmem:[#allocation8 + $0x70] sm:$0xff]
    %v203 = vld [vmem:[#allocation8 + $0x78] sm:$0xff]
    %v204 = vld [vmem:[#allocation8 + $0x80] sm:$0xff]
    %v205 = vld [vmem:[#allocation8 + $0x88] sm:$0xff]
    %v206 = vld [vmem:[#allocation8 + $0x90] sm:$0xff]
    %v207 = vld [vmem:[#allocation8 + $0xd0] sm:$0xff]
    %v208 = vld [vmem:[#allocation8 + $0xd8] sm:$0xff]
    %v209 = vld [vmem:[#allocation8 + $0xe0] sm:$0xff]
    %v210 = vld [vmem:[#allocation8 + $0xe8] sm:$0xff]
    %v211 = vld [vmem:[#allocation8 + $0xf0] sm:$0xff]
    %v212 = vld [vmem:[#allocation8 + $0x130] sm:$0xff]
    %v213 = vld [vmem:[#allocation8 + $0x138] sm:$0xff]
    %v214 = vld [vmem:[#allocation8 + $0x140] sm:$0xff]
    %v215 = vld [vmem:[#allocation8 + $0x148] sm:$0xff]
    %v216 = vld [vmem:[#allocation8 + $0x150] sm:$0xff]
    %v217 = vld [vmem:[#allocation8 + $0x190] sm:$0xff]
    %v218 = vld [vmem:[#allocation8 + $0x198] sm:$0xff]
    %v219 = vld [vmem:[#allocation8 + $0x1a0] sm:$0xff]
    %v220 = vld [vmem:[#allocation8 + $0x1a8] sm:$0xff]
    %v221 = vld [vmem:[#allocation8 + $0x1b0] sm:$0xff]
    %v222 = vld [vmem:[#allocation8 + $0x1f0] sm:$0xff]
    %v223 = vld [vmem:[#allocation8 + $0x1f8] sm:$0xff]
    %v224 = vld [vmem:[#allocation8 + $0x200] sm:$0xff]
    %v225 = vld [vmem:[#allocation8 + $0x208] sm:$0xff]
    %v226 = vld [vmem:[#allocation8 + $0x210] sm:$0xff]
    %v227 = vld [vmem:[#allocation8 + $0x250] sm:$0xff]
    %v228 = vld [vmem:[#allocation8 + $0x258] sm:$0xff]
    %v229 = vld [vmem:[#allocation8 + $0x260] sm:$0xff]
    %v230 = vld [vmem:[#allocation8 + $0x268] sm:$0xff]
    %v231 = vld [vmem:[#allocation8 + $0x270] sm:$0xff]
    %v232 = vld [vmem:[#allocation8 + $0x2b0] sm:$0xff]
    %v233 = vld [vmem:[#allocation8 + $0x2b8] sm:$0xff]
    %v234 = vld [vmem:[#allocation8 + $0x2c0] sm:$0xff]
    %v235 = vld [vmem:[#allocation8 + $0x2c8] sm:$0xff]
    %v236 = vld [vmem:[#allocation8 + $0x2d0] sm:$0xff]
    %v237 = vld [vmem:[#allocation8 + $0x310] sm:$0xff]
    %v238 = vld [vmem:[#allocation8 + $0x318] sm:$0xff]
    %v239 = vld [vmem:[#allocation8 + $0x320] sm:$0xff]
    %v240 = vld [vmem:[#allocation8 + $0x328] sm:$0xff]
    %v241 = vld [vmem:[#allocation8 + $0x330] sm:$0xff]
    %v242 = vld [vmem:[#allocation8 + $0x370] sm:$0xff]
    %v243 = vld [vmem:[#allocation8 + $0x378] sm:$0xff]
    %v244 = vld [vmem:[#allocation8 + $0x380] sm:$0xff]
    %v245 = vld [vmem:[#allocation8 + $0x388] sm:$0xff]
    %v246 = vld [vmem:[#allocation8 + $0x390] sm:$0xff]
    %v247 = vld [vmem:[#allocation8 + $0x3d0] sm:$0xff]
    %v248 = vld [vmem:[#allocation8 + $0x3d8] sm:$0xff]
    %v249 = vld [vmem:[#allocation8 + $0x3e0] sm:$0xff]
    %v250 = vld [vmem:[#allocation8 + $0x3e8] sm:$0xff]
    %v251 = vld [vmem:[#allocation8 + $0x3f0] sm:$0xff]
    %v252 = vld [vmem:[#allocation8 + $0x430] sm:$0xff]
    %v253 = vld [vmem:[#allocation8 + $0x438] sm:$0xff]
    %v254 = vld [vmem:[#allocation8 + $0x440] sm:$0xff]
    %v255 = vld [vmem:[#allocation8 + $0x448] sm:$0xff]
    %v256 = vld [vmem:[#allocation8 + $0x450] sm:$0xff]
    %v257 = vld [vmem:[#allocation8 + $0x490] sm:$0xff]
    %v258 = vld [vmem:[#allocation8 + $0x498] sm:$0xff]
    %v259 = vld [vmem:[#allocation8 + $0x4a0] sm:$0xff]
    %v260 = vld [vmem:[#allocation8 + $0x4a8] sm:$0xff]
    %v261 = vld [vmem:[#allocation8 + $0x4b0] sm:$0xff]
    %v262 = vld [vmem:[#allocation8 + $0x4f0] sm:$0xff]
    %v263 = vld [vmem:[#allocation8 + $0x4f8] sm:$0xff]
    %v264 = vld [vmem:[#allocation8 + $0x500] sm:$0xff]
    %v265 = vld [vmem:[#allocation8 + $0x508] sm:$0xff]
    %v266 = vld [vmem:[#allocation8 + $0x510] sm:$0xff]
    %v267 = vld [vmem:[#allocation8 + $0x550] sm:$0xff]
    %v268 = vld [vmem:[#allocation8 + $0x558] sm:$0xff]
    %v269 = vld [vmem:[#allocation8 + $0x560] sm:$0xff]
    %v270 = vld [vmem:[#allocation8 + $0x568] sm:$0xff]
    %v271 = vld [vmem:[#allocation8 + $0x570] sm:$0xff]
    %v272 = vld [vmem:[#allocation8 + $0x5b0] sm:$0xff]
    %v273 = vld [vmem:[#allocation8 + $0x5b8] sm:$0xff]
    %v274 = vld [vmem:[#allocation8 + $0x5c0] sm:$0xff]
    %v275 = vld [vmem:[#allocation8 + $0x5c8] sm:$0xff]
    %v276 = vld [vmem:[#allocation8 + $0x5d0] sm:$0xff]
    %277 = vmatpush.msra.mxu0 %v272
    %278 = vmatpush.msra.mxu0 %v267
    %279 = vmatpush.msra.mxu0 %v262
    %280 = vmatpush.msra.mxu0 %v257
    %281 = vmatpush.msra.mxu0 %v252
    %282 = vmatpush.msra.mxu0 %v247
    %283 = vmatpush.msra.mxu0 %v242
    %284 = vmatpush.msra.mxu0 %v237
    %285 = vmatpush.msra.mxu0 %v232
    %286 = vmatpush.msra.mxu0 %v227
    %287 = vmatpush.msra.mxu0 %v222
    %288 = vmatpush.msra.mxu0 %v217
    %289 = vmatpush.msra.mxu0 %v212
    %290 = vmatpush.msra.mxu0 %v207
    %291 = vmatpush.msra.mxu0 %v202
    %292 = vmatpush.msra.mxu0 %v197
    %293 = vmatmul.f32.gmra.mxu0 %v142
    %v294 = vpop.f32.mrf.mxu0
    %v295 = vadd.f32 0.0, %v294
    %296 = vdwg.mxu0
    %297 = vmatpush.msra.mxu0 %v273
    %298 = vmatpush.msra.mxu0 %v268
    %299 = vmatpush.msra.mxu0 %v263
    %300 = vmatpush.msra.mxu0 %v258
    %301 = vmatpush.msra.mxu0 %v253
    %302 = vmatpush.msra.mxu0 %v248
    %303 = vmatpush.msra.mxu0 %v243
    %304 = vmatpush.msra.mxu0 %v238
    %305 = vmatpush.msra.mxu0 %v233
    %306 = vmatpush.msra.mxu0 %v228
    %307 = vmatpush.msra.mxu0 %v223
    %308 = vmatpush.msra.mxu0 %v218
    %309 = vmatpush.msra.mxu0 %v213
    %310 = vmatpush.msra.mxu0 %v208
    %311 = vmatpush.msra.mxu0 %v203
    %312 = vmatpush.msra.mxu0 %v198
    %313 = vmatmul.f32.gmra.mxu0 %v142
    %v314 = vpop.f32.mrf.mxu0
    %v315 = vadd.f32 0.0, %v314
    %316 = vdwg.mxu0
    %317 = vmatpush.msra.mxu0 %v274
    %318 = vmatpush.msra.mxu0 %v269
    %319 = vmatpush.msra.mxu0 %v264
    %320 = vmatpush.msra.mxu0 %v259
    %321 = vmatpush.msra.mxu0 %v254
    %322 = vmatpush.msra.mxu0 %v249
    %323 = vmatpush.msra.mxu0 %v244
    %324 = vmatpush.msra.mxu0 %v239
    %325 = vmatpush.msra.mxu0 %v234
    %326 = vmatpush.msra.mxu0 %v229
    %327 = vmatpush.msra.mxu0 %v224
    %328 = vmatpush.msra.mxu0 %v219
    %329 = vmatpush.msra.mxu0 %v214
    %330 = vmatpush.msra.mxu0 %v209
    %331 = vmatpush.msra.mxu0 %v204
    %332 = vmatpush.msra.mxu0 %v199
    %333 = vmatmul.f32.gmra.mxu0 %v142
    %v334 = vpop.f32.mrf.mxu0
    %v335 = vadd.f32 0.0, %v334
    %336 = vdwg.mxu0
    %337 = vmatpush.msra.mxu0 %v275
    %338 = vmatpush.msra.mxu0 %v270
    %339 = vmatpush.msra.mxu0 %v265
    %340 = vmatpush.msra.mxu0 %v260
    %341 = vmatpush.msra.mxu0 %v255
    %342 = vmatpush.msra.mxu0 %v250
    %343 = vmatpush.msra.mxu0 %v245
    %344 = vmatpush.msra.mxu0 %v240
    %345 = vmatpush.msra.mxu0 %v235
    %346 = vmatpush.msra.mxu0 %v230
    %347 = vmatpush.msra.mxu0 %v225
    %348 = vmatpush.msra.mxu0 %v220
    %349 = vmatpush.msra.mxu0 %v215
    %350 = vmatpush.msra.mxu0 %v210
    %351 = vmatpush.msra.mxu0 %v205
    %352 = vmatpush.msra.mxu0 %v200
    %353 = vmatmul.f32.gmra.mxu0 %v142
    %v354 = vpop.f32.mrf.mxu0
    %v355 = vadd.f32 0.0, %v354
    %356 = vdwg.mxu0
    %357 = vmatpush.msra.mxu0 %v276
    %358 = vmatpush.msra.mxu0 %v271
    %359 = vmatpush.msra.mxu0 %v266
    %360 = vmatpush.msra.mxu0 %v261
    %361 = vmatpush.msra.mxu0 %v256
    %362 = vmatpush.msra.mxu0 %v251
    %363 = vmatpush.msra.mxu0 %v246
    %364 = vmatpush.msra.mxu0 %v241
    %365 = vmatpush.msra.mxu0 %v236
    %366 = vmatpush.msra.mxu0 %v231
    %367 = vmatpush.msra.mxu0 %v226
    %368 = vmatpush.msra.mxu0 %v221
    %369 = vmatpush.msra.mxu0 %v216
    %370 = vmatpush.msra.mxu0 %v211
    %371 = vmatpush.msra.mxu0 %v206
    %372 = vmatpush.msra.mxu0 %v201
    %373 = vmatmul.f32.gmra.mxu0 %v142
    %v374 = vpop.f32.mrf.mxu0
    %v375 = vadd.f32 0.0, %v374
    %376 = vdwg.mxu0
    %v377 = vld [vmem:[#allocation2] sm:$0xff]
    %v378 = vld [vmem:[#allocation2 + $0x8] sm:$0xff]
    %v379 = vld [vmem:[#allocation2 + $0x10] sm:$0xff]
    %v380 = vld [vmem:[#allocation2 + $0x18] sm:$0xff]
    %v382 = vrot.slane %v295, 1
    %v383 = vperm.slane %v295, 0
    %v384 = vperm.slane %v382, 0
    %v387 = vadd.f32 %v377, %v383
    %v388 = vadd.f32 %v378, %v383
    %v389 = vadd.f32 %v379, %v384
    %v390 = vadd.f32 %v380, %v384
    %v391 = vtanh.pop %v387
    %v392 = vtanh.pop %v388
    %v393 = vtanh.pop %v389
    %v394 = vtanh.pop %v390
    %v395 = vld [vmem:[%s5 + $0x1] sm:$0x1]
    %v397 = vperm.slane %v395, 0
    %v399 = vmul.f32 %v391, %v397
    %v400 = vmul.f32 %v392, %v397
    %v401 = vmul.f32 %v393, %v397
    %v402 = vmul.f32 %v394, %v397
    %403 = vadd.xlane.f32.xlu0 %v399
    %v404 = vpop.xlane.xlu0 %403
    %405 = vadd.xlane.f32.xlu0 %v400
    %v406 = vpop.xlane.xlu0 %405
    %407 = vadd.xlane.f32.xlu0 %v401
    %v408 = vpop.xlane.xlu0 %407
    %409 = vadd.xlane.f32.xlu0 %v402
    %v410 = vpop.xlane.xlu0 %409
    %v411 = vmax.f32 %v404, %v406
    %v412 = vrot.slane %v411, 4
    %v413 = vmax.f32 %v411, %v412
    %v414 = vrot.slane %v413, 2
    %v415 = vmax.f32 %v413, %v414
    %v416 = vrot.slane %v415, 1
    %v417 = vmax.f32 %v415, %v416
    %v418 = vmax.f32 %v408, %v410
    %v419 = vrot.slane %v418, 4
    %v420 = vmax.f32 %v418, %v419
    %v421 = vrot.slane %v420, 2
    %v422 = vmax.f32 %v420, %v421
    %v423 = vrot.slane %v422, 1
    %v424 = vmax.f32 %v422, %v423
    %v425 = vsub.f32 %v404, %v417
    %v426 = vsub.f32 %v406, %v417
    %v427 = vsub.f32 %v408, %v424
    %v428 = vsub.f32 %v410, %v424
    %v429 = vmul.f32 %v425, 1.442695
    %v430 = vpow.pop %v429
    %v431 = vmul.f32 %v426, 1.442695
    %v432 = vpow.pop %v431
    %v433 = vmul.f32 %v427, 1.442695
    %v434 = vpow.pop %v433
    %v435 = vmul.f32 %v428, 1.442695
    %v436 = vpow.pop %v435
    %v437 = vadd.f32 %v430, %v432
    %v438 = vrot.slane %v437, 4
    %v439 = vadd.f32 %v437, %v438
    %v440 = vrot.slane %v439, 2
    %v441 = vadd.f32 %v439, %v440
    %v442 = vrot.slane %v441, 1
    %v443 = vadd.f32 %v441, %v442
    %v444 = vadd.f32 %v434, %v436
    %v445 = vrot.slane %v444, 4
    %v446 = vadd.f32 %v444, %v445
    %v447 = vrot.slane %v446, 2
    %v448 = vadd.f32 %v446, %v447
    %v449 = vrot.slane %v448, 1
    %v450 = vadd.f32 %v448, %v449
    %v451 = vrcp.pop %v443
    %v452 = vmul.f32 %v443, %v451
    %v453 = vsub.f32 1.0, %v452
    %v454 = vmul.f32 %v451, %v453
    %v455 = vadd.f32 %v451, %v454
    %vm456 = vweird.f32 %v443
    %vm457 = vweird.f32 %v451
    %vm458 = vmor %vm456, %vm457
    %v459 = vsel %vm458, %v451, %v455
    %v460 = vand.u32 2147483647, %v443
    %vm461 = vcmp.eq.f32.partialorder %v460, 8.507059e+37
    %v462 = vand.u32 %v443, 2147483648
    %v463 = vor.u32 1.1754944e-38, %v462
    %v464 = vsel %vm461, %v463, %v459
    %v465 = vmul.f32 %v430, %v464
    %v466 = vmul.f32 %v432, %v464
    %v467 = vrcp.pop %v450
    %v468 = vmul.f32 %v450, %v467
    %v469 = vsub.f32 1.0, %v468
    %v470 = vmul.f32 %v467, %v469
    %v471 = vadd.f32 %v467, %v470
    %vm472 = vweird.f32 %v450
    %vm473 = vweird.f32 %v467
    %vm474 = vmor %vm472, %vm473
    %v475 = vsel %vm474, %v467, %v471
    %v476 = vand.u32 2147483647, %v450
    %vm477 = vcmp.eq.f32.partialorder %v476, 8.507059e+37
    %v478 = vand.u32 %v450, 2147483648
    %v479 = vor.u32 1.1754944e-38, %v478
    %v480 = vsel %vm477, %v479, %v475
    %v481 = vmul.f32 %v434, %v480
    %v482 = vmul.f32 %v436, %v480
    %v483 = vld [vmem:[#allocation5] sm:$0xff]
    %v484 = vld [vmem:[#allocation5 + $0x8] sm:$0xff]
    %v485 = vld [vmem:[#allocation5 + $0x10] sm:$0xff]
    %v486 = vld [vmem:[#allocation5 + $0x18] sm:$0xff]
    %v487 = vmul.f32 %v465, %v483
    %v488 = vmul.f32 %v466, %v484
    %v489 = vmul.f32 %v481, %v485
    %v490 = vmul.f32 %v482, %v486
    %v491 = vadd.f32 %v487, %v488
    %v492 = vrot.slane %v491, 4
    %v493 = vadd.f32 %v491, %v492
    %v494 = vrot.slane %v493, 2
    %v495 = vadd.f32 %v493, %v494
    %v496 = vrot.slane %v495, 1
    %v497 = vadd.f32 %v495, %v496
    %v498 = vadd.f32 %v489, %v490
    %v499 = vrot.slane %v498, 4
    %v500 = vadd.f32 %v498, %v499
    %v501 = vrot.slane %v500, 2
    %v502 = vadd.f32 %v500, %v501
    %v503 = vrot.slane %v502, 1
    %v504 = vadd.f32 %v502, %v503
    %vm507 = vcmask 1041409
    %v508 = vsel %vm507, %v504, %v497
    %v510 = vld [vmem:[#allocation10] sm:$0xff]
    %v511 = vld [vmem:[#allocation10 + $0x8] sm:$0xff]
    %v512 = vld [vmem:[#allocation10 + $0x10] sm:$0xff]
    %v513 = vld [vmem:[#allocation10 + $0x18] sm:$0xff]
    %v514 = vld [vmem:[#allocation10 + $0x20] sm:$0xff]
    %v515 = vld [vmem:[#allocation10 + $0x28] sm:$0xff]
    %v516 = vld [vmem:[#allocation10 + $0x30] sm:$0xff]
    %v517 = vld [vmem:[#allocation10 + $0x38] sm:$0xff]
    %v518 = vld [vmem:[#allocation10 + $0x40] sm:$0xff]
    %v519 = vld [vmem:[#allocation10 + $0x48] sm:$0xff]
    %v520 = vld [vmem:[#allocation10 + $0x50] sm:$0xff]
    %v521 = vld [vmem:[#allocation10 + $0x58] sm:$0xff]
    %v522 = vld [vmem:[#allocation10 + $0x60] sm:$0xff]
    %v523 = vld [vmem:[#allocation10 + $0x68] sm:$0xff]
    %v524 = vld [vmem:[#allocation10 + $0x70] sm:$0xff]
    %v525 = vld [vmem:[#allocation10 + $0x78] sm:$0xff]
    %v526 = vld [vmem:[#allocation10 + $0x80] sm:$0xff]
    %v527 = vld [vmem:[#allocation10 + $0x88] sm:$0xff]
    %v528 = vld [vmem:[#allocation10 + $0x90] sm:$0xff]
    %v529 = vld [vmem:[#allocation10 + $0x98] sm:$0xff]
    %v530 = vld [vmem:[#allocation10 + $0xa0] sm:$0xff]
    %v531 = vld [vmem:[#allocation10 + $0xa8] sm:$0xff]
    %v532 = vld [vmem:[#allocation10 + $0xb0] sm:$0xff]
    %v533 = vld [vmem:[#allocation10 + $0xb8] sm:$0xff]
    %v534 = vld [vmem:[#allocation10 + $0xc0] sm:$0xff]
    %v535 = vld [vmem:[#allocation10 + $0xc8] sm:$0xff]
    %v536 = vld [vmem:[#allocation10 + $0xd0] sm:$0xff]
    %v537 = vld [vmem:[#allocation10 + $0xd8] sm:$0xff]
    %v538 = vld [vmem:[#allocation10 + $0xe0] sm:$0xff]
    %v539 = vld [vmem:[#allocation10 + $0xe8] sm:$0xff]
    %v540 = vld [vmem:[#allocation10 + $0xf0] sm:$0xff]
    %v541 = vld [vmem:[#allocation10 + $0xf8] sm:$0xff]
    %v542 = vld [vmem:[%s5 + $0x2] sm:$0x1]
    %v544 = vperm.slane %v542, 0
    %546 = vmatpush.msra.mxu0 %v525
    %547 = vmatpush.msra.mxu0 %v524
    %548 = vmatpush.msra.mxu0 %v523
    %549 = vmatpush.msra.mxu0 %v522
    %550 = vmatpush.msra.mxu0 %v521
    %551 = vmatpush.msra.mxu0 %v520
    %552 = vmatpush.msra.mxu0 %v519
    %553 = vmatpush.msra.mxu0 %v518
    %554 = vmatpush.msra.mxu0 %v517
    %555 = vmatpush.msra.mxu0 %v516
    %556 = vmatpush.msra.mxu0 %v515
    %557 = vmatpush.msra.mxu0 %v514
    %558 = vmatpush.msra.mxu0 %v513
    %559 = vmatpush.msra.mxu0 %v512
    %560 = vmatpush.msra.mxu0 %v511
    %561 = vmatpush.msra.mxu0 %v510
    %562 = vmatmul.f32.gmra.mxu0 %v195
    %v563 = vpop.f32.mrf.mxu0
    %v564 = vadd.f32 %v544, %v563
    %565 = vdwg.mxu0
    %566 = vmatpush.msra.mxu0 %v541
    %567 = vmatpush.msra.mxu0 %v540
    %568 = vmatpush.msra.mxu0 %v539
    %569 = vmatpush.msra.mxu0 %v538
    %570 = vmatpush.msra.mxu0 %v537
    %571 = vmatpush.msra.mxu0 %v536
    %572 = vmatpush.msra.mxu0 %v535
    %573 = vmatpush.msra.mxu0 %v534
    %574 = vmatpush.msra.mxu0 %v533
    %575 = vmatpush.msra.mxu0 %v532
    %576 = vmatpush.msra.mxu0 %v531
    %577 = vmatpush.msra.mxu0 %v530
    %578 = vmatpush.msra.mxu0 %v529
    %579 = vmatpush.msra.mxu0 %v528
    %580 = vmatpush.msra.mxu0 %v527
    %581 = vmatpush.msra.mxu0 %v526
    %582 = vmatmul.f32.gmra.mxu0 %v508
    %v583 = vpop.f32.mrf.mxu0
    %v584 = vadd.f32 %v564, %v583
    %585 = vdwg.mxu0
    %v586 = vld [vmem:[#allocation8 + $0x38] sm:$0xff]
    %v587 = vld [vmem:[#allocation8 + $0x40] sm:$0xff]
    %v588 = vld [vmem:[#allocation8 + $0x48] sm:$0xff]
    %v589 = vld [vmem:[#allocation8 + $0x50] sm:$0xff]
    %v590 = vld [vmem:[#allocation8 + $0x98] sm:$0xff]
    %v591 = vld [vmem:[#allocation8 + $0xa0] sm:$0xff]
    %v592 = vld [vmem:[#allocation8 + $0xa8] sm:$0xff]
    %v593 = vld [vmem:[#allocation8 + $0xb0] sm:$0xff]
    %v594 = vld [vmem:[#allocation8 + $0xf8] sm:$0xff]
    %v595 = vld [vmem:[#allocation8 + $0x100] sm:$0xff]
    %v596 = vld [vmem:[#allocation8 + $0x108] sm:$0xff]
    %v597 = vld [vmem:[#allocation8 + $0x110] sm:$0xff]
    %v598 = vld [vmem:[#allocation8 + $0x158] sm:$0xff]
    %v599 = vld [vmem:[#allocation8 + $0x160] sm:$0xff]
    %v600 = vld [vmem:[#allocation8 + $0x168] sm:$0xff]
    %v601 = vld [vmem:[#allocation8 + $0x170] sm:$0xff]
    %v602 = vld [vmem:[#allocation8 + $0x1b8] sm:$0xff]
    %v603 = vld [vmem:[#allocation8 + $0x1c0] sm:$0xff]
    %v604 = vld [vmem:[#allocation8 + $0x1c8] sm:$0xff]
    %v605 = vld [vmem:[#allocation8 + $0x1d0] sm:$0xff]
    %v606 = vld [vmem:[#allocation8 + $0x218] sm:$0xff]
    %v607 = vld [vmem:[#allocation8 + $0x220] sm:$0xff]
    %v608 = vld [vmem:[#allocation8 + $0x228] sm:$0xff]
    %v609 = vld [vmem:[#allocation8 + $0x230] sm:$0xff]
    %v610 = vld [vmem:[#allocation8 + $0x278] sm:$0xff]
    %v611 = vld [vmem:[#allocation8 + $0x280] sm:$0xff]
    %v612 = vld [vmem:[#allocation8 + $0x288] sm:$0xff]
    %v613 = vld [vmem:[#allocation8 + $0x290] sm:$0xff]
    %v614 = vld [vmem:[#allocation8 + $0x2d8] sm:$0xff]
    %v615 = vld [vmem:[#allocation8 + $0x2e0] sm:$0xff]
    %v616 = vld [vmem:[#allocation8 + $0x2e8] sm:$0xff]
    %v617 = vld [vmem:[#allocation8 + $0x2f0] sm:$0xff]
    %v618 = vld [vmem:[#allocation8 + $0x338] sm:$0xff]
    %v619 = vld [vmem:[#allocation8 + $0x340] sm:$0xff]
    %v620 = vld [vmem:[#allocation8 + $0x348] sm:$0xff]
    %v621 = vld [vmem:[#allocation8 + $0x350] sm:$0xff]
    %v622 = vld [vmem:[#allocation8 + $0x398] sm:$0xff]
    %v623 = vld [vmem:[#allocation8 + $0x3a0] sm:$0xff]
    %v624 = vld [vmem:[#allocation8 + $0x3a8] sm:$0xff]
    %v625 = vld [vmem:[#allocation8 + $0x3b0] sm:$0xff]
    %v626 = vld [vmem:[#allocation8 + $0x3f8] sm:$0xff]
    %v627 = vld [vmem:[#allocation8 + $0x400] sm:$0xff]
    %v628 = vld [vmem:[#allocation8 + $0x408] sm:$0xff]
    %v629 = vld [vmem:[#allocation8 + $0x410] sm:$0xff]
    %v630 = vld [vmem:[#allocation8 + $0x458] sm:$0xff]
    %v631 = vld [vmem:[#allocation8 + $0x460] sm:$0xff]
    %v632 = vld [vmem:[#allocation8 + $0x468] sm:$0xff]
    %v633 = vld [vmem:[#allocation8 + $0x470] sm:$0xff]
    %v634 = vld [vmem:[#allocation8 + $0x4b8] sm:$0xff]
    %v635 = vld [vmem:[#allocation8 + $0x4c0] sm:$0xff]
    %v636 = vld [vmem:[#allocation8 + $0x4c8] sm:$0xff]
    %v637 = vld [vmem:[#allocation8 + $0x4d0] sm:$0xff]
    %v638 = vld [vmem:[#allocation8 + $0x518] sm:$0xff]
    %v639 = vld [vmem:[#allocation8 + $0x520] sm:$0xff]
    %v640 = vld [vmem:[#allocation8 + $0x528] sm:$0xff]
    %v641 = vld [vmem:[#allocation8 + $0x530] sm:$0xff]
    %v642 = vld [vmem:[#allocation8 + $0x578] sm:$0xff]
    %v643 = vld [vmem:[#allocation8 + $0x580] sm:$0xff]
    %v644 = vld [vmem:[#allocation8 + $0x588] sm:$0xff]
    %v645 = vld [vmem:[#allocation8 + $0x590] sm:$0xff]
    %v646 = vld [vmem:[#allocation8 + $0x5d8] sm:$0xff]
    %v647 = vld [vmem:[#allocation8 + $0x5e0] sm:$0xff]
    %v648 = vld [vmem:[#allocation8 + $0x5e8] sm:$0xff]
    %v649 = vld [vmem:[#allocation8 + $0x5f0] sm:$0xff]
    %650 = vmatpush.msra.mxu0 %v646
    %651 = vmatpush.msra.mxu0 %v642
    %652 = vmatpush.msra.mxu0 %v638
    %653 = vmatpush.msra.mxu0 %v634
    %654 = vmatpush.msra.mxu0 %v630
    %655 = vmatpush.msra.mxu0 %v626
    %656 = vmatpush.msra.mxu0 %v622
    %657 = vmatpush.msra.mxu0 %v618
    %658 = vmatpush.msra.mxu0 %v614
    %659 = vmatpush.msra.mxu0 %v610
    %660 = vmatpush.msra.mxu0 %v606
    %661 = vmatpush.msra.mxu0 %v602
    %662 = vmatpush.msra.mxu0 %v598
    %663 = vmatpush.msra.mxu0 %v594
    %664 = vmatpush.msra.mxu0 %v590
    %665 = vmatpush.msra.mxu0 %v586
    %666 = vmatmul.f32.gmra.mxu0 %v584
    %v667 = vpop.f32.mrf.mxu0
    %v668 = vadd.f32 %v315, %v667
    %669 = vdwg.mxu0
    %670 = vmatpush.msra.mxu0 %v647
    %671 = vmatpush.msra.mxu0 %v643
    %672 = vmatpush.msra.mxu0 %v639
    %673 = vmatpush.msra.mxu0 %v635
    %674 = vmatpush.msra.mxu0 %v631
    %675 = vmatpush.msra.mxu0 %v627
    %676 = vmatpush.msra.mxu0 %v623
    %677 = vmatpush.msra.mxu0 %v619
    %678 = vmatpush.msra.mxu0 %v615
    %679 = vmatpush.msra.mxu0 %v611
    %680 = vmatpush.msra.mxu0 %v607
    %681 = vmatpush.msra.mxu0 %v603
    %682 = vmatpush.msra.mxu0 %v599
    %683 = vmatpush.msra.mxu0 %v595
    %684 = vmatpush.msra.mxu0 %v591
    %685 = vmatpush.msra.mxu0 %v587
    %686 = vmatmul.f32.gmra.mxu0 %v584
    %v687 = vpop.f32.mrf.mxu0
    %v688 = vadd.f32 %v335, %v687
    %689 = vdwg.mxu0
    %690 = vmatpush.msra.mxu0 %v648
    %691 = vmatpush.msra.mxu0 %v644
    %692 = vmatpush.msra.mxu0 %v640
    %693 = vmatpush.msra.mxu0 %v636
    %694 = vmatpush.msra.mxu0 %v632
    %695 = vmatpush.msra.mxu0 %v628
    %696 = vmatpush.msra.mxu0 %v624
    %697 = vmatpush.msra.mxu0 %v620
    %698 = vmatpush.msra.mxu0 %v616
    %699 = vmatpush.msra.mxu0 %v612
    %700 = vmatpush.msra.mxu0 %v608
    %701 = vmatpush.msra.mxu0 %v604
    %702 = vmatpush.msra.mxu0 %v600
    %703 = vmatpush.msra.mxu0 %v596
    %704 = vmatpush.msra.mxu0 %v592
    %705 = vmatpush.msra.mxu0 %v588
    %706 = vmatmul.f32.gmra.mxu0 %v584
    %v707 = vpop.f32.mrf.mxu0
    %v708 = vadd.f32 %v355, %v707
    %709 = vdwg.mxu0
    %710 = vmatpush.msra.mxu0 %v649
    %711 = vmatpush.msra.mxu0 %v645
    %712 = vmatpush.msra.mxu0 %v641
    %713 = vmatpush.msra.mxu0 %v637
    %714 = vmatpush.msra.mxu0 %v633
    %715 = vmatpush.msra.mxu0 %v629
    %716 = vmatpush.msra.mxu0 %v625
    %717 = vmatpush.msra.mxu0 %v621
    %718 = vmatpush.msra.mxu0 %v617
    %719 = vmatpush.msra.mxu0 %v613
    %720 = vmatpush.msra.mxu0 %v609
    %721 = vmatpush.msra.mxu0 %v605
    %722 = vmatpush.msra.mxu0 %v601
    %723 = vmatpush.msra.mxu0 %v597
    %724 = vmatpush.msra.mxu0 %v593
    %725 = vmatpush.msra.mxu0 %v589
    %726 = vmatmul.f32.gmra.mxu0 %v584
    %v727 = vpop.f32.mrf.mxu0
    %v728 = vadd.f32 %v375, %v727
    %729 = vdwg.mxu0
    %v730 = vld [vmem:[%s5 + $0x3] sm:$0xf]
    %v732 = vperm.slane %v730, 0
    %v733 = vperm.slane %v730, 1
    %v734 = vperm.slane %v730, 2
    %v735 = vperm.slane %v730, 3
    %v740 = vadd.f32 %v668, %v732
    %v741 = vadd.f32 %v688, %v733
    %v742 = vadd.f32 %v708, %v734
    %v743 = vadd.f32 %v728, %v735
    %v744 = vxor.u32 %v740, 2147483648
    %v745 = vmul.f32 %v744, 1.442695
    %v746 = vpow.pop %v745
    %v747 = vadd.f32 %v746, 1.0
    %v748 = vrcp.pop %v747
    %v749 = vmul.f32 %v747, %v748
    %v750 = vsub.f32 1.0, %v749
    %v751 = vmul.f32 %v748, %v750
    %v752 = vadd.f32 %v748, %v751
    %vm753 = vweird.f32 %v747
    %vm754 = vweird.f32 %v748
    %vm755 = vmor %vm753, %vm754
    %v756 = vsel %vm755, %v748, %v752
    %v757 = vand.u32 2147483647, %v747
    %vm758 = vcmp.eq.f32.partialorder %v757, 8.507059e+37
    %v759 = vand.u32 %v747, 2147483648
    %v760 = vor.u32 1.1754944e-38, %v759
    %v761 = vsel %vm758, %v760, %v756
    %v762 = vmul.f32 1.0, %v761
    %v763 = vxor.u32 %v741, 2147483648
    %v764 = vmul.f32 %v763, 1.442695
    %v765 = vpow.pop %v764
    %v766 = vadd.f32 %v765, 1.0
    %v767 = vrcp.pop %v766
    %v768 = vmul.f32 %v766, %v767
    %v769 = vsub.f32 1.0, %v768
    %v770 = vmul.f32 %v767, %v769
    %v771 = vadd.f32 %v767, %v770
    %vm772 = vweird.f32 %v766
    %vm773 = vweird.f32 %v767
    %vm774 = vmor %vm772, %vm773
    %v775 = vsel %vm774, %v767, %v771
    %v776 = vand.u32 2147483647, %v766
    %vm777 = vcmp.eq.f32.partialorder %v776, 8.507059e+37
    %v778 = vand.u32 %v766, 2147483648
    %v779 = vor.u32 1.1754944e-38, %v778
    %v780 = vsel %vm777, %v779, %v775
    %v781 = vmul.f32 1.0, %v780
    %v782 = vtanh.pop %v742
    %v783 = vxor.u32 %v743, 2147483648
    %v784 = vmul.f32 %v783, 1.442695
    %v785 = vpow.pop %v784
    %v786 = vadd.f32 %v785, 1.0
    %v787 = vrcp.pop %v786
    %v788 = vmul.f32 %v786, %v787
    %v789 = vsub.f32 1.0, %v788
    %v790 = vmul.f32 %v787, %v789
    %v791 = vadd.f32 %v787, %v790
    %vm792 = vweird.f32 %v786
    %vm793 = vweird.f32 %v787
    %vm794 = vmor %vm792, %vm793
    %v795 = vsel %vm794, %v787, %v791
    %v796 = vand.u32 2147483647, %v786
    %vm797 = vcmp.eq.f32.partialorder %v796, 8.507059e+37
    %v798 = vand.u32 %v786, 2147483648
    %v799 = vor.u32 1.1754944e-38, %v798
    %v800 = vsel %vm797, %v799, %v795
    %v801 = vmul.f32 1.0, %v800
    %v802 = vmul.f32 %v781, %v143
    %v803 = vmul.f32 %v762, %v782
    %v804 = vadd.f32 %v802, %v803
    %v805 = vtanh.pop %v804
    %v806 = vmul.f32 %v801, %v805
    %v807 = vld [vmem:[#allocation8 + $0x58] sm:$0xff]
    %v808 = vld [vmem:[#allocation8 + $0xb8] sm:$0xff]
    %v809 = vld [vmem:[#allocation8 + $0x118] sm:$0xff]
    %v810 = vld [vmem:[#allocation8 + $0x178] sm:$0xff]
    %v811 = vld [vmem:[#allocation8 + $0x1d8] sm:$0xff]
    %v812 = vld [vmem:[#allocation8 + $0x238] sm:$0xff]
    %v813 = vld [vmem:[#allocation8 + $0x298] sm:$0xff]
    %v814 = vld [vmem:[#allocation8 + $0x2f8] sm:$0xff]
    %v815 = vld [vmem:[#allocation8 + $0x358] sm:$0xff]
    %v816 = vld [vmem:[#allocation8 + $0x3b8] sm:$0xff]
    %v817 = vld [vmem:[#allocation8 + $0x418] sm:$0xff]
    %v818 = vld [vmem:[#allocation8 + $0x478] sm:$0xff]
    %v819 = vld [vmem:[#allocation8 + $0x4d8] sm:$0xff]
    %v820 = vld [vmem:[#allocation8 + $0x538] sm:$0xff]
    %v821 = vld [vmem:[#allocation8 + $0x598] sm:$0xff]
    %v822 = vld [vmem:[#allocation8 + $0x5f8] sm:$0xff]
    %v823 = vld [vmem:[%s5 + $0x7] sm:$0x1]
    %v825 = vperm.slane %v823, 0
    %827 = vmatpush.msra.mxu0 %v822
    %828 = vmatpush.msra.mxu0 %v821
    %829 = vmatpush.msra.mxu0 %v820
    %830 = vmatpush.msra.mxu0 %v819
    %831 = vmatpush.msra.mxu0 %v818
    %832 = vmatpush.msra.mxu0 %v817
    %833 = vmatpush.msra.mxu0 %v816
    %834 = vmatpush.msra.mxu0 %v815
    %835 = vmatpush.msra.mxu0 %v814
    %836 = vmatpush.msra.mxu0 %v813
    %837 = vmatpush.msra.mxu0 %v812
    %838 = vmatpush.msra.mxu0 %v811
    %839 = vmatpush.msra.mxu0 %v810
    %840 = vmatpush.msra.mxu0 %v809
    %841 = vmatpush.msra.mxu0 %v808
    %842 = vmatpush.msra.mxu0 %v807
    %843 = vmatmul.f32.gmra.mxu0 %v806
    %v844 = vpop.f32.mrf.mxu0
    %v845 = vadd.f32 %v825, %v844
    %846 = vdwg.mxu0
    %vm847 = vcmask 1041408
    %v848 = vsel %vm847, %v845, -inf
    %849 = vmax.xlane.f32.xlu0 %v848
    %v850 = vpop.xlane.xlu0 %849
    %v851 = vsub.f32 %v845, %v850
    %v852 = vmul.f32 %v851, 1.442695
    %v853 = vpow.pop %v852
    %v854 = vsel %vm847, %v853, 0.0
    %855 = vadd.xlane.f32.xlu0 %v854
    %v856 = vpop.xlane.xlu0 %855
    %v857 = vlog2.pop %v856
    %v858 = vmul.f32 %v857, 0.6931472
    %v859 = vsub.f32 %v851, %v858
    %860 = vst [vmem:[#allocation11] sm:$0x3] %v859
    %861 = vst [vmem:[%s7] sm:$0x3] %v806
    %862 = vst [vmem:[%s7 + $0x2] sm:$0x3] %v804
    // Predicated region
    $region38: #{decoder_forward.1} parent=1 // pred_check
      _
    $region39: #{decoder_forward.1} parent=1 // pred_check_branch
      %864 = sbr.rel (0) target = $region41
    $region40: #{decoder_forward.1} parent=1 // pred_region
      %866 = vsyncadd [#allocation7], 0
      %s868 = sshll.u32 [#allocation11], 4
      %s869 = int_to_ptr.vmem [resolvable:$true] %s868
      %s870 = sshll.u32 %s6, 4
      %s871 = int_to_ptr.hbm [resolvable:$true] %s870
      %873 = dma.vmem_to_hbm [thread:$0]  %s869, 32, %s871, [#allocation7]
    $region41: #{decoder_forward.1} parent=1 // pred_fallthru
      _
    // Predicated region
    $region42: #{decoder_forward.1} parent=1 // pred_check
      _
    $region43: #{decoder_forward.1} parent=1 // pred_check_branch
      %875 = sbr.rel (0) target = $region45
    $region44: #{decoder_forward.1} parent=1 // pred_region
      _
    $region45: #{decoder_forward.1} parent=1 // pred_fallthru
      _
    // Predicated region
    $region46: #{decoder_forward.1} parent=1 // pred_check
      _
    $region47: #{decoder_forward.1} parent=1 // pred_check_branch
      %877 = sbr.rel (0) target = $region49
    $region48: #{decoder_forward.1} parent=1 // pred_region
      %879 = dma.done [#allocation7], 32
    $region49: #{decoder_forward.1} parent=1 // pred_fallthru
      _
    // Predicated region
    $region50: #{decoder_forward.1} parent=1 // pred_check
      _
    $region51: #{decoder_forward.1} parent=1 // pred_check_branch
      %881 = sbr.rel (0) target = $region53
    $region52: #{decoder_forward.1} parent=1 // pred_region
      _
    $region53: #{decoder_forward.1} parent=1 // pred_fallthru
      _
    %882 = vsyncpa [#allocation6], 1
    %883 = vsyncpa [#allocation9], 1
    %884 = vsyncpa [#allocation7], 1

</llo_original>
